<compile_context>
chip_gen: v6e
topology: v6e:2x2x1
jax: 0.10.0
libtpu: 0.0.40
codegen_flags: <defaults>
</compile_context>

<pallas_src>
import jax
import jax.numpy as jnp
from jax.experimental import pallas as pl
from jax.experimental.pallas import tpu as pltpu


def _round_up(a, m):
    return (a + m - 1) // m * m


def _pad2(a, shape):
    return jnp.pad(a, [(0, t - s) for s, t in zip(a.shape, shape)])


def _make_dqn_kernel(n_obs, mxu_dtype):
    # For tiny input widths, layer 1 is done with VPU FMAs instead of an MXU matmul.
    use_fma_layer1 = n_obs <= 8

    def kernel(x_ref, w1_ref, b1_ref, w2_ref, b2_ref, w3_ref, b3_ref, o_ref):
        x = x_ref[...]                                   # (TB, n_obs) f32

        # ---- layer 1: x @ W1 + b1 ------------------------------------------------
        if use_fma_layer1:
            # K is tiny: unrolled broadcast multiply-adds on the VALU slots
            # (kept in f32 on all chips; v5e has no bf16 VPU path).
            acc = b1_ref[...]                            # (1, Hp) f32
            for k in range(n_obs):
                acc = acc + x[:, k:k + 1] * w1_ref[k:k + 1, :]
        else:
            acc = (
                jnp.dot(x.astype(mxu_dtype), w1_ref[...].astype(mxu_dtype),
                        preferred_element_type=jnp.float32)
                + b1_ref[...]
            )
        h1 = jnp.tanh(acc)                               # (TB, Hp) f32, padded cols = 0

        # ---- layer 2: tanh(h1 @ W2 + b2) ------------------------------------------
        h2 = jnp.tanh(
            jnp.dot(h1.astype(mxu_dtype), w2_ref[...],
                    preferred_element_type=jnp.float32)
            + b2_ref[...]
        )                                                # (TB, Hp) f32, padded cols = 0

        # ---- layer 3: h2 @ W3 + b3 (Q-values) -------------------------------------
        out = (
            jnp.dot(h2.astype(mxu_dtype), w3_ref[...],
                    preferred_element_type=jnp.float32)
            + b3_ref[...]
        )                                                # (TB, Ap) f32
        # (If used purely for greedy action selection, an argmax over the Q columns
        #  could be fused here instead of writing the full (TB, Ap) slab.)
        o_ref[...] = out.astype(o_ref.dtype)

    return kernel


def dqn_forward(x, params, *, use_bf16_matmul=False, block_batch=512):
    """x: (B, n_obs) float32. params: dict of w1,b1,w2,b2,w3,b3 (weights as (in,out))."""
    w1, b1 = params["w1"], params["b1"]
    w2, b2 = params["w2"], params["b2"]
    w3, b3 = params["w3"], params["b3"]

    B, n_obs = x.shape
    hidden = w1.shape[1]
    n_act = w3.shape[1]

    # Pad feature dims to multiples of 128 lanes (zero padding is exact:
    # tanh(0) = 0, and zero rows/cols contribute nothing downstream).
    Hp = _round_up(hidden, 128)
    Ap = _round_up(n_act, 128)

    w1p = _pad2(w1, (n_obs, Hp)).astype(jnp.float32)     # layer-1 stays f32 (VPU FMAs)
    b1p = _pad2(b1, (1, Hp)).astype(jnp.float32)
    w2p = _pad2(w2, (Hp, Hp))
    b2p = _pad2(b2, (1, Hp)).astype(jnp.float32)
    w3p = _pad2(w3, (Hp, Ap))
    b3p = _pad2(b3, (1, Ap)).astype(jnp.float32)

    mxu_dtype = jnp.bfloat16 if use_bf16_matmul else jnp.float32
    w2p = w2p.astype(mxu_dtype)
    w3p = w3p.astype(mxu_dtype)

    # Batch tiling: weights stay resident, x / out are pipelined over batch tiles.
    TB = _round_up(min(block_batch, _round_up(B, 8)), 8)
    B_pad = _round_up(B, TB)
    if B_pad != B:
        x = jnp.pad(x, ((0, B_pad - B), (0, 0)))
    nb = B_pad // TB

    kernel = _make_dqn_kernel(n_obs, mxu_dtype)

    out = pl.pallas_call(
        kernel,
        out_shape=jax.ShapeDtypeStruct((B_pad, Ap), jnp.float32),
        grid=(nb,),
        in_specs=[
            pl.BlockSpec((TB, n_obs), lambda i: (i, 0)),   # x: batch-tiled
            pl.BlockSpec((n_obs, Hp), lambda i: (0, 0)),   # w1: resident
            pl.BlockSpec((1, Hp), lambda i: (0, 0)),       # b1
            pl.BlockSpec((Hp, Hp), lambda i: (0, 0)),      # w2
            pl.BlockSpec((1, Hp), lambda i: (0, 0)),       # b2
            pl.BlockSpec((Hp, Ap), lambda i: (0, 0)),      # w3
            pl.BlockSpec((1, Ap), lambda i: (0, 0)),       # b3
        ],
        out_specs=pl.BlockSpec((TB, Ap), lambda i: (i, 0)),
        compiler_params=pltpu.CompilerParams(
            dimension_semantics=("parallel",)),
    )(x, w1p, b1p, w2p, b2p, w3p, b3p)

    return out[:B, :n_act]


def init_dqn_params(key, n_obs, n_act, hidden=64):
    """Deterministic init mimicking PyTorch's default Linear init (U[-1/sqrt(fan_in), +])."""
    ks = jax.random.split(key, 6)

    def lin(kw, kb, fan_in, fan_out):
        bound = 1.0 / jnp.sqrt(float(fan_in))
        w = jax.random.uniform(kw, (fan_in, fan_out), jnp.float32, -bound, bound)
        b = jax.random.uniform(kb, (1, fan_out), jnp.float32, -bound, bound)
        return w, b

    w1, b1 = lin(ks[0], ks[1], n_obs, hidden)
    w2, b2 = lin(ks[2], ks[3], hidden, hidden)
    w3, b3 = lin(ks[4], ks[5], hidden, n_act)
    return {"w1": w1, "b1": b1, "w2": w2, "b2": b2, "w3": w3, "b3": b3}


def dqn_reference(x, p):
    h1 = jnp.tanh(x @ p["w1"] + p["b1"])
    h2 = jnp.tanh(h1 @ p["w2"] + p["b2"])
    return h2 @ p["w3"] + p["b3"]


if __name__ == "__main__":
    key = jax.random.PRNGKey(0)
    k_param, k_x, k_x2 = jax.random.split(key, 3)

    # Discrete-action pendulum: 2-d observation (theta, theta_dot), 31 discrete torques.
    batch, n_obs, n_act = 8, 2, 31
    params = init_dqn_params(k_param, n_obs, n_act)

    # -- small batch, f32 path -------------------------------------------------------
    x = jax.random.normal(k_x, (batch, n_obs), jnp.float32)
    ref = dqn_reference(x, params)
    out = jax.block_until_ready(dqn_forward(x, params))
    assert out.shape == (batch, n_act), out.shape
    assert jnp.allclose(out, ref, atol=1e-5, rtol=1e-5), "f32 mismatch vs JAX reference"

    # -- bf16-MXU path (f32 accumulation), looser tolerance ---------------------------
    out_bf16 = jax.block_until_ready(dqn_forward(x, params, use_bf16_matmul=True))
    assert jnp.allclose(out_bf16, ref, atol=5e-2, rtol=5e-2), "bf16 mismatch vs reference"

    # -- larger batch exercising the parallel batch grid (3 tiles of 128 rows) --------
    big_batch = 384
    xb = jax.random.normal(k_x2, (big_batch, n_obs), jnp.float32)
    refb = dqn_reference(xb, params)
    outb = jax.block_until_ready(dqn_forward(xb, params, block_batch=128))
    assert outb.shape == (big_batch, n_act), outb.shape
    assert jnp.allclose(outb, refb, atol=1e-5, rtol=1e-5), "batched mismatch vs reference"

    print("KERNEL_OK")
</pallas_src>

<mosaic_0001>
module attributes {stable_mosaic.version = 11 : i64} {
  func.func @kernel(%arg0: i32, %arg1: memref<8x2xf32, #tpu.memory_space<vmem>>, %arg2: memref<2x128xf32, #tpu.memory_space<vmem>>, %arg3: memref<1x128xf32, #tpu.memory_space<vmem>>, %arg4: memref<128x128xf32, #tpu.memory_space<vmem>>, %arg5: memref<1x128xf32, #tpu.memory_space<vmem>>, %arg6: memref<128x128xf32, #tpu.memory_space<vmem>>, %arg7: memref<1x128xf32, #tpu.memory_space<vmem>>, %arg8: memref<8x128xf32, #tpu.memory_space<vmem>>) attributes {dimension_semantics = [#tpu.dimension_semantics<parallel>], iteration_bounds = array<i64: 1>, scalar_prefetch = 0 : i64, scratch_operands = 0 : i64, tpu.core_type = #tpu.core_type<tc>, window_params = [{transform_indices = @transform_0, window_bounds = array<i64: 8, 2>}, {pipeline_mode = #tpu.pipeline_mode<synchronous>, transform_indices = @transform_1, window_bounds = array<i64: 2, 128>}, {pipeline_mode = #tpu.pipeline_mode<synchronous>, transform_indices = @transform_2, window_bounds = array<i64: 1, 128>}, {pipeline_mode = #tpu.pipeline_mode<synchronous>, transform_indices = @transform_3, window_bounds = array<i64: 128, 128>}, {pipeline_mode = #tpu.pipeline_mode<synchronous>, transform_indices = @transform_4, window_bounds = array<i64: 1, 128>}, {pipeline_mode = #tpu.pipeline_mode<synchronous>, transform_indices = @transform_5, window_bounds = array<i64: 128, 128>}, {pipeline_mode = #tpu.pipeline_mode<synchronous>, transform_indices = @transform_6, window_bounds = array<i64: 1, 128>}, {transform_indices = @transform_7, window_bounds = array<i64: 8, 128>}]} {
    %c0 = arith.constant 0 : index
    %c0_0 = arith.constant 0 : index
    %0 = vector.load %arg1[%c0, %c0_0] : memref<8x2xf32, #tpu.memory_space<vmem>>, vector<8x2xf32>
    %c0_1 = arith.constant 0 : index
    %c0_2 = arith.constant 0 : index
    %1 = vector.load %arg3[%c0_1, %c0_2] : memref<1x128xf32, #tpu.memory_space<vmem>>, vector<1x128xf32>
    %2 = vector.extract_strided_slice %0 {offsets = [0, 0], sizes = [8, 1], strides = [1, 1]} : vector<8x2xf32> to vector<8x1xf32>
    %c0_3 = arith.constant 0 : index
    %c0_4 = arith.constant 0 : index
    %3 = vector.load %arg2[%c0_3, %c0_4] : memref<2x128xf32, #tpu.memory_space<vmem>>, vector<1x128xf32>
    %4 = vector.broadcast %2 : vector<8x1xf32> to vector<8x128xf32>
    %5 = vector.broadcast %3 : vector<1x128xf32> to vector<8x128xf32>
    %6 = arith.mulf %4, %5 : vector<8x128xf32>
    %7 = vector.broadcast %1 : vector<1x128xf32> to vector<8x128xf32>
    %8 = arith.addf %7, %6 : vector<8x128xf32>
    %9 = vector.extract_strided_slice %0 {offsets = [0, 1], sizes = [8, 1], strides = [1, 1]} : vector<8x2xf32> to vector<8x1xf32>
    %c1 = arith.constant 1 : index
    %c0_5 = arith.constant 0 : index
    %10 = vector.load %arg2[%c1, %c0_5] : memref<2x128xf32, #tpu.memory_space<vmem>>, vector<1x128xf32>
    %11 = vector.broadcast %9 : vector<8x1xf32> to vector<8x128xf32>
    %12 = vector.broadcast %10 : vector<1x128xf32> to vector<8x128xf32>
    %13 = arith.mulf %11, %12 : vector<8x128xf32>
    %14 = arith.addf %8, %13 : vector<8x128xf32>
    %15 = math.tanh %14 : vector<8x128xf32>
    %c0_6 = arith.constant 0 : index
    %c0_7 = arith.constant 0 : index
    %16 = vector.load %arg4[%c0_6, %c0_7] : memref<128x128xf32, #tpu.memory_space<vmem>>, vector<128x128xf32>
    %cst = arith.constant dense<0.000000e+00> : vector<8x128xf32>
    %17 = tpu.matmul %15, %16, %cst {dimension_numbers = #tpu.dot_dimension_numbers<[1], [0], [0], [1], [0, 0, 1, 1], [], []>} : vector<8x128xf32>, vector<128x128xf32>, vector<8x128xf32> -> vector<8x128xf32>
    %c0_8 = arith.constant 0 : index
    %c0_9 = arith.constant 0 : index
    %18 = vector.load %arg5[%c0_8, %c0_9] : memref<1x128xf32, #tpu.memory_space<vmem>>, vector<1x128xf32>
    %19 = vector.broadcast %18 : vector<1x128xf32> to vector<8x128xf32>
    %20 = arith.addf %17, %19 : vector<8x128xf32>
    %21 = math.tanh %20 : vector<8x128xf32>
    %c0_10 = arith.constant 0 : index
    %c0_11 = arith.constant 0 : index
    %22 = vector.load %arg6[%c0_10, %c0_11] : memref<128x128xf32, #tpu.memory_space<vmem>>, vector<128x128xf32>
    %cst_12 = arith.constant dense<0.000000e+00> : vector<8x128xf32>
    %23 = tpu.matmul %21, %22, %cst_12 {dimension_numbers = #tpu.dot_dimension_numbers<[1], [0], [0], [1], [0, 0, 1, 1], [], []>} : vector<8x128xf32>, vector<128x128xf32>, vector<8x128xf32> -> vector<8x128xf32>
    %c0_13 = arith.constant 0 : index
    %c0_14 = arith.constant 0 : index
    %24 = vector.load %arg7[%c0_13, %c0_14] : memref<1x128xf32, #tpu.memory_space<vmem>>, vector<1x128xf32>
    %25 = vector.broadcast %24 : vector<1x128xf32> to vector<8x128xf32>
    %26 = arith.addf %23, %25 : vector<8x128xf32>
    %c0_15 = arith.constant 0 : index
    %c0_16 = arith.constant 0 : index
    %27 = vector.load %arg8[%c0_15, %c0_16] : memref<8x128xf32, #tpu.memory_space<vmem>>, vector<8x128xf32>
    tpu.vector_store %arg8[%c0_15, %c0_16], %26 {strides = array<i32>} : memref<8x128xf32, #tpu.memory_space<vmem>>, vector<8x128xf32>,
    return
  }
  func.func @transform_0(%arg0: i32) -> (i32, i32) {
    %c0_i32 = arith.constant 0 : i32
    %c0_i32_0 = arith.constant 0 : i32
    return %arg0, %c0_i32 : i32, i32
  }
  func.func @transform_1(%arg0: i32) -> (i32, i32) {
    %c0_i32 = arith.constant 0 : i32
    %c0_i32_0 = arith.constant 0 : i32
    %c0_i32_1 = arith.constant 0 : i32
    return %c0_i32, %c0_i32_0 : i32, i32
  }
  func.func @transform_2(%arg0: i32) -> (i32, i32) {
    %c0_i32 = arith.constant 0 : i32
    %c0_i32_0 = arith.constant 0 : i32
    %c0_i32_1 = arith.constant 0 : i32
    return %c0_i32, %c0_i32_0 : i32, i32
  }
  func.func @transform_3(%arg0: i32) -> (i32, i32) {
    %c0_i32 = arith.constant 0 : i32
    %c0_i32_0 = arith.constant 0 : i32
    %c0_i32_1 = arith.constant 0 : i32
    return %c0_i32, %c0_i32_0 : i32, i32
  }
  func.func @transform_4(%arg0: i32) -> (i32, i32) {
    %c0_i32 = arith.constant 0 : i32
    %c0_i32_0 = arith.constant 0 : i32
    %c0_i32_1 = arith.constant 0 : i32
    return %c0_i32, %c0_i32_0 : i32, i32
  }
  func.func @transform_5(%arg0: i32) -> (i32, i32) {
    %c0_i32 = arith.constant 0 : i32
    %c0_i32_0 = arith.constant 0 : i32
    %c0_i32_1 = arith.constant 0 : i32
    return %c0_i32, %c0_i32_0 : i32, i32
  }
  func.func @transform_6(%arg0: i32) -> (i32, i32) {
    %c0_i32 = arith.constant 0 : i32
    %c0_i32_0 = arith.constant 0 : i32
    %c0_i32_1 = arith.constant 0 : i32
    return %c0_i32, %c0_i32_0 : i32, i32
  }
  func.func @transform_7(%arg0: i32) -> (i32, i32) {
    %c0_i32 = arith.constant 0 : i32
    %c0_i32_0 = arith.constant 0 : i32
    return %arg0, %c0_i32 : i32, i32
  }
}

</mosaic_0001>

<llo_original>
// kernel: tpu_custom_call.1
$region0: #{tpu_custom_call.1}
  #allocation0 [shape = 'u32[]', space=smem, size = 0x4, offset = 0x4, fixed_abs, tag = 'smem constant byte address 0x4 - core index']
  #allocation1 [shape = 'u32[144,128]{1,0:T(1,128)}', space=vmem, size = 0x12000, scoped, tag = 'internal scratch']
  %s0 = inlined_call_operand.vmem [shape: f32[8,2], index: 0, kind: input, shape index: {}]
  %s1 = inlined_call_operand.vmem [shape: f32[2,128], index: 1, kind: input, shape index: {}]
  %s2 = inlined_call_operand.vmem [shape: f32[1,128], index: 2, kind: input, shape index: {}]
  %s3 = inlined_call_operand.hbm [shape: f32[128,128], index: 3, kind: input, shape index: {}]
  %s4 = inlined_call_operand.vmem [shape: f32[1,128], index: 4, kind: input, shape index: {}]
  %s5 = inlined_call_operand.hbm [shape: f32[128,128], index: 5, kind: input, shape index: {}]
  %s6 = inlined_call_operand.vmem [shape: f32[1,128], index: 6, kind: input, shape index: {}]
  %s7 = inlined_call_operand.hbm [shape: f32[8,128], index: 7, kind: output, shape index: {}]
  %s8 = sld [smem:[#allocation0]]
  $region46: #{tpu_custom_call.1} parent=0
    _
  %s10 = ssub.s32 1, %s8
  %s11 = scalar_select 0, %s10, %s8
  $region1: #{tpu_custom_call.1} parent=0
    #allocation2 [shape = 'u8[65536]{0}', space=vmem, size = 0x10000, scoped, tag = 'input window, operand 3, single buffered']
    #allocation3 [shape = 's32[1]{0}', space=sflag, size = 0x4, scoped, tag = 'scoped memory for tpu_custom_call.1']
    #allocation4 [shape = 's32[1]{0}', space=sflag, size = 0x4, scoped, tag = 'scoped memory for tpu_custom_call.1']
    #allocation5 [shape = 'u8[65536]{0}', space=vmem, size = 0x10000, scoped, tag = 'input window, operand 5, single buffered']
    #allocation6 [shape = 's32[1]{0}', space=sflag, size = 0x4, scoped, tag = 'scoped memory for tpu_custom_call.1']
    #allocation7 [shape = 'u8[4096]{0}', space=vmem, size = 0x1000, scoped, tag = 'output window, operand 0, single buffered']
    %12 = vsyncpa [#allocation3], 0
    %13 = vsyncpa [#allocation6], 0
    %14 = vsyncpa [#allocation4], 0
    // Predicated region
    $region2: #{tpu_custom_call.1} parent=1 // pred_check
      _
    $region3: #{tpu_custom_call.1} parent=1 // pred_check_branch
      %16 = sbr.rel (0) target = $region5
    $region4: #{tpu_custom_call.1} parent=1 // pred_region
      _
    $region5: #{tpu_custom_call.1} parent=1 // pred_fallthru
      _
    // Predicated region
    $region6: #{tpu_custom_call.1} parent=1 // pred_check
      _
    $region7: #{tpu_custom_call.1} parent=1 // pred_check_branch
      %18 = sbr.rel (0) target = $region9
    $region8: #{tpu_custom_call.1} parent=1 // pred_region
      _
    $region9: #{tpu_custom_call.1} parent=1 // pred_fallthru
      _
    // Predicated region
    $region10: #{tpu_custom_call.1} parent=1 // pred_check
      _
    $region11: #{tpu_custom_call.1} parent=1 // pred_check_branch
      %20 = sbr.rel (0) target = $region13
    $region12: #{tpu_custom_call.1} parent=1 // pred_region
      _
    $region13: #{tpu_custom_call.1} parent=1 // pred_fallthru
      _
    // Predicated region
    $region14: #{tpu_custom_call.1} parent=1 // pred_check
      _
    $region15: #{tpu_custom_call.1} parent=1 // pred_check_branch
      %22 = sbr.rel (0) target = $region17
    $region16: #{tpu_custom_call.1} parent=1 // pred_region
      %s24 = ssub.s32 2048, 2048
      %25 = vsyncadd [#allocation3], %s24
      %s26 = sshll.u32 [#allocation2], 4
      %s27 = int_to_ptr.vmem [resolvable:$true] %s26
      %32 = dma.hbm_to_vmem [thread:$0]  %s3, 2048, %s27, [#allocation3], 128, 128, 8
    $region17: #{tpu_custom_call.1} parent=1 // pred_fallthru
      _
    // Predicated region
    $region18: #{tpu_custom_call.1} parent=1 // pred_check
      _
    $region19: #{tpu_custom_call.1} parent=1 // pred_check_branch
      %34 = sbr.rel (0) target = $region21
    $region20: #{tpu_custom_call.1} parent=1 // pred_region
      _
    $region21: #{tpu_custom_call.1} parent=1 // pred_fallthru
      _
    // Predicated region
    $region22: #{tpu_custom_call.1} parent=1 // pred_check
      _
    $region23: #{tpu_custom_call.1} parent=1 // pred_check_branch
      %36 = sbr.rel (0) target = $region25
    $region24: #{tpu_custom_call.1} parent=1 // pred_region
      %s38 = ssub.s32 2048, 2048
      %39 = vsyncadd [#allocation6], %s38
      %s40 = sshll.u32 [#allocation5], 4
      %s41 = int_to_ptr.vmem [resolvable:$true] %s40
      %46 = dma.hbm_to_vmem [thread:$0]  %s5, 2048, %s41, [#allocation6], 128, 128, 8
    $region25: #{tpu_custom_call.1} parent=1 // pred_fallthru
      _
    // Predicated region
    $region26: #{tpu_custom_call.1} parent=1 // pred_check
      _
    $region27: #{tpu_custom_call.1} parent=1 // pred_check_branch
      %48 = sbr.rel (0) target = $region29
    $region28: #{tpu_custom_call.1} parent=1 // pred_region
      _
    $region29: #{tpu_custom_call.1} parent=1 // pred_fallthru
      _
    // Predicated region
    $region30: #{tpu_custom_call.1} parent=1 // pred_check
      _
    $region31: #{tpu_custom_call.1} parent=1 // pred_check_branch
      %50 = sbr.rel (0) target = $region33
    $region32: #{tpu_custom_call.1} parent=1 // pred_region
      %51 = dma.done [#allocation3], 2048
    $region33: #{tpu_custom_call.1} parent=1 // pred_fallthru
      _
    // Predicated region
    $region34: #{tpu_custom_call.1} parent=1 // pred_check
      _
    $region35: #{tpu_custom_call.1} parent=1 // pred_check_branch
      %53 = sbr.rel (0) target = $region37
    $region36: #{tpu_custom_call.1} parent=1 // pred_region
      %54 = dma.done [#allocation6], 2048
    $region37: #{tpu_custom_call.1} parent=1 // pred_fallthru
      _
    %v55 = vld [vmem:[%s0] sm:$0xff]
    %v56 = vld [vmem:[%s2] sm:$0x1]
    %v57 = vld [vmem:[%s1] sm:$0x1]
    %59 = vset.pattern.permute.xlu0 0
    %60 = vperm.xlu0 %59, %v55
    %v61 = vpop.permute.xlu0 %60
    %v63 = vlaneseq
    %v64 = vshrl.u32 %v63, 7
    %v65 = vsub.s32 0, %v64
    %v66 = vrot.slane %v57, %v65
    %v67 = vmul.f32 %v61, %v66
    %v69 = vlaneseq
    %v70 = vshrl.u32 %v69, 7
    %v71 = vsub.s32 0, %v70
    %v72 = vrot.slane %v56, %v71
    %v74 = vadd.f32 %v72, %v67
    %v75 = vld [vmem:[%s1 + $0x1] sm:$0x1]
    %76 = vset.pattern.permute.xlu0 1
    %77 = vperm.xlu0 %76, %v55
    %v78 = vpop.permute.xlu0 %77
    %v80 = vlaneseq
    %v81 = vshrl.u32 %v80, 7
    %v82 = vsub.s32 0, %v81
    %v83 = vrot.slane %v75, %v82
    %v84 = vmul.f32 %v78, %v83
    %v85 = vadd.f32 %v74, %v84
    %v86 = vtanh.pop %v85
    %v87 = vld [vmem:[#allocation2] sm:$0xff]
    %v88 = vld [vmem:[#allocation2 + $0x8] sm:$0xff]
    %v89 = vld [vmem:[#allocation2 + $0x10] sm:$0xff]
    %v90 = vld [vmem:[#allocation2 + $0x18] sm:$0xff]
    %v91 = vld [vmem:[#allocation2 + $0x20] sm:$0xff]
    %v92 = vld [vmem:[#allocation2 + $0x28] sm:$0xff]
    %v93 = vld [vmem:[#allocation2 + $0x30] sm:$0xff]
    %v94 = vld [vmem:[#allocation2 + $0x38] sm:$0xff]
    %v95 = vld [vmem:[#allocation2 + $0x40] sm:$0xff]
    %v96 = vld [vmem:[#allocation2 + $0x48] sm:$0xff]
    %v97 = vld [vmem:[#allocation2 + $0x50] sm:$0xff]
    %v98 = vld [vmem:[#allocation2 + $0x58] sm:$0xff]
    %v99 = vld [vmem:[#allocation2 + $0x60] sm:$0xff]
    %v100 = vld [vmem:[#allocation2 + $0x68] sm:$0xff]
    %v101 = vld [vmem:[#allocation2 + $0x70] sm:$0xff]
    %v102 = vld [vmem:[#allocation2 + $0x78] sm:$0xff]
    %v103 = vld [vmem:[%s4] sm:$0x1]
    %v105 = vlaneseq
    %v106 = vshrl.u32 %v105, 7
    %v107 = vsub.s32 0, %v106
    %v108 = vrot.slane %v103, %v107
    %110 = vmatprep.subr.mxu0 0.0
    %111 = vmatpush1.msra.mxu0 %v102
    %112 = vmatprep.subr.mxu0 0.0
    %113 = vmatpush1.msra.mxu0 %v101
    %114 = vmatprep.subr.mxu0 0.0
    %115 = vmatpush1.msra.mxu0 %v100
    %116 = vmatprep.subr.mxu0 0.0
    %117 = vmatpush1.msra.mxu0 %v99
    %118 = vmatprep.subr.mxu0 0.0
    %119 = vmatpush1.msra.mxu0 %v98
    %120 = vmatprep.subr.mxu0 0.0
    %121 = vmatpush1.msra.mxu0 %v97
    %122 = vmatprep.subr.mxu0 0.0
    %123 = vmatpush1.msra.mxu0 %v96
    %124 = vmatprep.subr.mxu0 0.0
    %125 = vmatpush1.msra.mxu0 %v95
    %126 = vmatprep.subr.mxu0 0.0
    %127 = vmatpush1.msra.mxu0 %v94
    %128 = vmatprep.subr.mxu0 0.0
    %129 = vmatpush1.msra.mxu0 %v93
    %130 = vmatprep.subr.mxu0 0.0
    %131 = vmatpush1.msra.mxu0 %v92
    %132 = vmatprep.subr.mxu0 0.0
    %133 = vmatpush1.msra.mxu0 %v91
    %134 = vmatprep.subr.mxu0 0.0
    %135 = vmatpush1.msra.mxu0 %v90
    %136 = vmatprep.subr.mxu0 0.0
    %137 = vmatpush1.msra.mxu0 %v89
    %138 = vmatprep.subr.mxu0 0.0
    %139 = vmatpush1.msra.mxu0 %v88
    %140 = vmatprep.subr.mxu0 0.0
    %141 = vmatpush1.msra.mxu0 %v87
    %142 = vmatprep.subr.mxu0 0.0
    %143 = vmatpush2.msra.mxu0 0.0
    %144 = vmatprep.subr.mxu0 0.0
    %145 = vmatpush2.msra.mxu0 0.0
    %146 = vmatprep.subr.mxu0 0.0
    %147 = vmatpush2.msra.mxu0 0.0
    %148 = vmatprep.subr.mxu0 0.0
    %149 = vmatpush2.msra.mxu0 0.0
    %150 = vmatprep.subr.mxu0 0.0
    %151 = vmatpush2.msra.mxu0 0.0
    %152 = vmatprep.subr.mxu0 0.0
    %153 = vmatpush2.msra.mxu0 0.0
    %154 = vmatprep.subr.mxu0 0.0
    %155 = vmatpush2.msra.mxu0 0.0
    %156 = vmatprep.subr.mxu0 0.0
    %157 = vmatpush2.msra.mxu0 0.0
    %158 = vmatprep.subr.mxu0 0.0
    %159 = vmatpush2.msra.mxu0 0.0
    %160 = vmatprep.subr.mxu0 0.0
    %161 = vmatpush2.msra.mxu0 0.0
    %162 = vmatprep.subr.mxu0 0.0
    %163 = vmatpush2.msra.mxu0 0.0
    %164 = vmatprep.subr.mxu0 0.0
    %165 = vmatpush2.msra.mxu0 0.0
    %166 = vmatprep.subr.mxu0 0.0
    %167 = vmatpush2.msra.mxu0 0.0
    %168 = vmatprep.subr.mxu0 0.0
    %169 = vmatpush2.msra.mxu0 0.0
    %170 = vmatprep.subr.mxu0 0.0
    %171 = vmatpush2.msra.mxu0 0.0
    %172 = vmatprep.subr.mxu0 0.0
    %173 = vmatpush2.msra.mxu0 0.0
    %174 = vmatprep.mubr.f32.mxu0 0.0
    %175 = vmatmul.mubr.f32.gmra.mxu0 %v86
    %v176 = vpop.f32.mrf.mxu0
    %v177 = vadd.f32 %v108, %v176
    %v178 = vpop.f32.mrf.mxu0
    %179 = vdwg.mxu0
    %v180 = vtanh.pop %v177
    %v181 = vld [vmem:[#allocation5] sm:$0xff]
    %v182 = vld [vmem:[#allocation5 + $0x8] sm:$0xff]
    %v183 = vld [vmem:[#allocation5 + $0x10] sm:$0xff]
    %v184 = vld [vmem:[#allocation5 + $0x18] sm:$0xff]
    %v185 = vld [vmem:[#allocation5 + $0x20] sm:$0xff]
    %v186 = vld [vmem:[#allocation5 + $0x28] sm:$0xff]
    %v187 = vld [vmem:[#allocation5 + $0x30] sm:$0xff]
    %v188 = vld [vmem:[#allocation5 + $0x38] sm:$0xff]
    %v189 = vld [vmem:[#allocation5 + $0x40] sm:$0xff]
    %v190 = vld [vmem:[#allocation5 + $0x48] sm:$0xff]
    %v191 = vld [vmem:[#allocation5 + $0x50] sm:$0xff]
    %v192 = vld [vmem:[#allocation5 + $0x58] sm:$0xff]
    %v193 = vld [vmem:[#allocation5 + $0x60] sm:$0xff]
    %v194 = vld [vmem:[#allocation5 + $0x68] sm:$0xff]
    %v195 = vld [vmem:[#allocation5 + $0x70] sm:$0xff]
    %v196 = vld [vmem:[#allocation5 + $0x78] sm:$0xff]
    %v197 = vld [vmem:[%s6] sm:$0x1]
    %v199 = vlaneseq
    %v200 = vshrl.u32 %v199, 7
    %v201 = vsub.s32 0, %v200
    %v202 = vrot.slane %v197, %v201
    %204 = vmatprep.subr.mxu0 0.0
    %205 = vmatpush1.msra.mxu0 %v196
    %206 = vmatprep.subr.mxu0 0.0
    %207 = vmatpush1.msra.mxu0 %v195
    %208 = vmatprep.subr.mxu0 0.0
    %209 = vmatpush1.msra.mxu0 %v194
    %210 = vmatprep.subr.mxu0 0.0
    %211 = vmatpush1.msra.mxu0 %v193
    %212 = vmatprep.subr.mxu0 0.0
    %213 = vmatpush1.msra.mxu0 %v192
    %214 = vmatprep.subr.mxu0 0.0
    %215 = vmatpush1.msra.mxu0 %v191
    %216 = vmatprep.subr.mxu0 0.0
    %217 = vmatpush1.msra.mxu0 %v190
    %218 = vmatprep.subr.mxu0 0.0
    %219 = vmatpush1.msra.mxu0 %v189
    %220 = vmatprep.subr.mxu0 0.0
    %221 = vmatpush1.msra.mxu0 %v188
    %222 = vmatprep.subr.mxu0 0.0
    %223 = vmatpush1.msra.mxu0 %v187
    %224 = vmatprep.subr.mxu0 0.0
    %225 = vmatpush1.msra.mxu0 %v186
    %226 = vmatprep.subr.mxu0 0.0
    %227 = vmatpush1.msra.mxu0 %v185
    %228 = vmatprep.subr.mxu0 0.0
    %229 = vmatpush1.msra.mxu0 %v184
    %230 = vmatprep.subr.mxu0 0.0
    %231 = vmatpush1.msra.mxu0 %v183
    %232 = vmatprep.subr.mxu0 0.0
    %233 = vmatpush1.msra.mxu0 %v182
    %234 = vmatprep.subr.mxu0 0.0
    %235 = vmatpush1.msra.mxu0 %v181
    %236 = vmatprep.subr.mxu0 0.0
    %237 = vmatpush2.msra.mxu0 0.0
    %238 = vmatprep.subr.mxu0 0.0
    %239 = vmatpush2.msra.mxu0 0.0
    %240 = vmatprep.subr.mxu0 0.0
    %241 = vmatpush2.msra.mxu0 0.0
    %242 = vmatprep.subr.mxu0 0.0
    %243 = vmatpush2.msra.mxu0 0.0
    %244 = vmatprep.subr.mxu0 0.0
    %245 = vmatpush2.msra.mxu0 0.0
    %246 = vmatprep.subr.mxu0 0.0
    %247 = vmatpush2.msra.mxu0 0.0
    %248 = vmatprep.subr.mxu0 0.0
    %249 = vmatpush2.msra.mxu0 0.0
    %250 = vmatprep.subr.mxu0 0.0
    %251 = vmatpush2.msra.mxu0 0.0
    %252 = vmatprep.subr.mxu0 0.0
    %253 = vmatpush2.msra.mxu0 0.0
    %254 = vmatprep.subr.mxu0 0.0
    %255 = vmatpush2.msra.mxu0 0.0
    %256 = vmatprep.subr.mxu0 0.0
    %257 = vmatpush2.msra.mxu0 0.0
    %258 = vmatprep.subr.mxu0 0.0
    %259 = vmatpush2.msra.mxu0 0.0
    %260 = vmatprep.subr.mxu0 0.0
    %261 = vmatpush2.msra.mxu0 0.0
    %262 = vmatprep.subr.mxu0 0.0
    %263 = vmatpush2.msra.mxu0 0.0
    %264 = vmatprep.subr.mxu0 0.0
    %265 = vmatpush2.msra.mxu0 0.0
    %266 = vmatprep.subr.mxu0 0.0
    %267 = vmatpush2.msra.mxu0 0.0
    %268 = vmatprep.mubr.f32.mxu0 0.0
    %269 = vmatmul.mubr.f32.gmra.mxu0 %v180
    %v270 = vpop.f32.mrf.mxu0
    %v271 = vadd.f32 %v202, %v270
    %v272 = vpop.f32.mrf.mxu0
    %273 = vdwg.mxu0
    %274 = vst [vmem:[#allocation7] sm:$0xff] %v271
    // Predicated region
    $region38: #{tpu_custom_call.1} parent=1 // pred_check
      _
    $region39: #{tpu_custom_call.1} parent=1 // pred_check_branch
      %276 = sbr.rel (0) target = $region41
    $region40: #{tpu_custom_call.1} parent=1 // pred_region
      %s278 = ssub.s32 128, 128
      %279 = vsyncadd [#allocation4], %s278
      %s281 = sshll.u32 [#allocation7], 4
      %s282 = int_to_ptr.vmem [resolvable:$true] %s281
      %284 = dma.vmem_to_hbm [thread:$0]  %s282, 128, %s7, [#allocation4]
    $region41: #{tpu_custom_call.1} parent=1 // pred_fallthru
      _
    // Predicated region
    $region42: #{tpu_custom_call.1} parent=1 // pred_check
      _
    $region43: #{tpu_custom_call.1} parent=1 // pred_check_branch
      %286 = sbr.rel (0) target = $region45
    $region44: #{tpu_custom_call.1} parent=1 // pred_region
      %287 = dma.done [#allocation4], 128
    $region45: #{tpu_custom_call.1} parent=1 // pred_fallthru
      _
    %288 = vsyncpa [#allocation3], 1
    %289 = vsyncpa [#allocation6], 1
    %290 = vsyncpa [#allocation4], 1

</llo_original>
